<compile_context>
chip_gen: v7x
topology: tpu7x:2x2x1
jax: 0.10.0
libtpu: 0.0.40
codegen_flags: <defaults>
</compile_context>

<pallas_src>
import functools

import jax
import jax.numpy as jnp
from jax.experimental import pallas as pl
from jax.experimental.pallas import tpu as pltpu

NUM_STATE = 2    # MountainCar-v0 observation dim
HIDDEN = 64
OUT = 1
TILE_B = 128     # batch lanes per grid step (multiple of 128 -> lane-dense I/O)


def critic_kernel(x_ref, w1_ref, b1_ref, w2_ref, b2_ref, out_ref):
    """One batch tile.

    x_ref  : (NUM_STATE, TILE_B)  observations, batch on the lane axis
    w1_ref : (HIDDEN, NUM_STATE)  fc1 weight (out_features x in_features)
    b1_ref : (HIDDEN, 1)          fc1 bias
    w2_ref : (HIDDEN, OUT)        state_value weight (in_features x out_features)
    b2_ref : (1, OUT)             state_value bias
    out_ref: (1, TILE_B)          state values, batch on the lane axis
    """
    # ---- fc1 on the VPU: h[j, b] = sum_s w1[j, s] * x[s, b] + b1[j] ----------
    h = b1_ref[...]                                   # (HIDDEN, 1), broadcasts over lanes
    for s in range(NUM_STATE):                        # unrolled: NUM_STATE == 2
        h = h + w1_ref[:, s:s + 1] * x_ref[s:s + 1, :]   # (HIDDEN, TILE_B)
    # ---- leaky_relu (negative_slope = 0.01, PyTorch default) -----------------
    h = jnp.where(h >= 0.0, h, 0.01 * h)
    # ---- state_value: VPU multiply + XLU sublane-reduce -----------------------
    v = jnp.sum(h * w2_ref[...], axis=0, keepdims=True) + b2_ref[...]  # (1, TILE_B)
    out_ref[...] = v.astype(out_ref.dtype)


@functools.partial(jax.jit, static_argnames=("tile_b",))
def critic_forward(x, w1, b1, w2, b2, *, tile_b=TILE_B):
    """Forward pass of the Critic.

    Args (math layouts, matching `x @ w1 + b1` semantics):
      x : (B, NUM_STATE)  f32
      w1: (NUM_STATE, HIDDEN)   b1: (1, HIDDEN)
      w2: (HIDDEN, OUT)         b2: (1, OUT)
    Returns: (B, OUT) f32 state values.
    """
    B = x.shape[0]
    n_tiles = max(1, pl.cdiv(B, tile_b))
    b_pad = n_tiles * tile_b

    # Batch onto the lane axis; pad lanes to a whole number of tiles.
    x_t = jnp.zeros((NUM_STATE, b_pad), jnp.float32).at[:, :B].set(x.T)
    w1_k = w1.T.astype(jnp.float32)                   # (HIDDEN, NUM_STATE)
    b1_k = b1.reshape(HIDDEN, 1).astype(jnp.float32)  # (HIDDEN, 1)
    w2_k = w2.reshape(HIDDEN, OUT).astype(jnp.float32)
    b2_k = b2.reshape(1, OUT).astype(jnp.float32)

    out = pl.pallas_call(
        critic_kernel,
        out_shape=jax.ShapeDtypeStruct((1, b_pad), jnp.float32),
        grid=(n_tiles,),
        in_specs=[
            pl.BlockSpec((NUM_STATE, tile_b), lambda i: (0, i)),  # stream x
            pl.BlockSpec((HIDDEN, NUM_STATE), lambda i: (0, 0)),  # VMEM-resident
            pl.BlockSpec((HIDDEN, 1), lambda i: (0, 0)),          # VMEM-resident
            pl.BlockSpec((HIDDEN, OUT), lambda i: (0, 0)),        # VMEM-resident
            pl.BlockSpec((1, OUT), lambda i: (0, 0)),             # VMEM-resident
        ],
        out_specs=pl.BlockSpec((1, tile_b), lambda i: (0, i)),    # stream out (lane-dense)
        compiler_params=pltpu.CompilerParams(
            dimension_semantics=("parallel",),   # independent batch tiles
        ),
    )(x_t, w1_k, b1_k, w2_k, b2_k)

    # (1, b_pad) -> slice valid lanes -> (B, 1); reshape is layout-free.
    return out[:, :B].reshape(B, OUT)


def init_params(key):
    # Mimics PyTorch Linear's uniform(-1/sqrt(fan_in), 1/sqrt(fan_in)) init.
    k1, k2, k3, k4 = jax.random.split(key, 4)
    bound1 = 1.0 / (NUM_STATE ** 0.5)
    bound2 = 1.0 / (HIDDEN ** 0.5)
    w1 = jax.random.uniform(k1, (NUM_STATE, HIDDEN), jnp.float32, -bound1, bound1)
    b1 = jax.random.uniform(k2, (1, HIDDEN), jnp.float32, -bound1, bound1)
    w2 = jax.random.uniform(k3, (HIDDEN, OUT), jnp.float32, -bound2, bound2)
    b2 = jax.random.uniform(k4, (1, OUT), jnp.float32, -bound2, bound2)
    return w1, b1, w2, b2


if __name__ == "__main__":
    key = jax.random.PRNGKey(0)
    k_x, k_p = jax.random.split(key)

    batch = 256                      # two batch tiles -> exercises the grid path
    x = jax.random.normal(k_x, (batch, NUM_STATE), jnp.float32)
    w1, b1, w2, b2 = init_params(k_p)

    value = critic_forward(x, w1, b1, w2, b2)
    value = jax.block_until_ready(value)

    # Pure-JAX reference check
    h_ref = x @ w1 + b1
    h_ref = jnp.where(h_ref >= 0.0, h_ref, 0.01 * h_ref)
    v_ref = h_ref @ w2 + b2

    assert value.shape == (batch, OUT)
    assert jnp.allclose(value, v_ref, atol=1e-5, rtol=1e-5), float(
        jnp.max(jnp.abs(value - v_ref)))

    print("KERNEL_OK")
</pallas_src>

<mosaic_0001>
module attributes {stable_mosaic.version = 11 : i64} {
  func.func @critic_kernel(%arg0: i32, %arg1: memref<2x128xf32, #tpu.memory_space<vmem>>, %arg2: memref<64x2xf32, #tpu.memory_space<vmem>>, %arg3: memref<64x1xf32, #tpu.memory_space<vmem>>, %arg4: memref<64x1xf32, #tpu.memory_space<vmem>>, %arg5: memref<1x1xf32, #tpu.memory_space<vmem>>, %arg6: memref<1x128xf32, #tpu.memory_space<vmem>>) attributes {dimension_semantics = [#tpu.dimension_semantics<parallel>], iteration_bounds = array<i64: 2>, scalar_prefetch = 0 : i64, scratch_operands = 0 : i64, tpu.core_type = #tpu.core_type<tc>, window_params = [{transform_indices = @transform_0, window_bounds = array<i64: 2, 128>}, {pipeline_mode = #tpu.pipeline_mode<synchronous>, transform_indices = @transform_1, window_bounds = array<i64: 64, 2>}, {pipeline_mode = #tpu.pipeline_mode<synchronous>, transform_indices = @transform_2, window_bounds = array<i64: 64, 1>}, {pipeline_mode = #tpu.pipeline_mode<synchronous>, transform_indices = @transform_3, window_bounds = array<i64: 64, 1>}, {pipeline_mode = #tpu.pipeline_mode<synchronous>, transform_indices = @transform_4, window_bounds = array<i64: 1, 1>}, {transform_indices = @transform_5, window_bounds = array<i64: 1, 128>}]} {
    %c0 = arith.constant 0 : index
    %c0_0 = arith.constant 0 : index
    %0 = vector.load %arg3[%c0, %c0_0] : memref<64x1xf32, #tpu.memory_space<vmem>>, vector<64x1xf32>
    %c0_1 = arith.constant 0 : index
    %c0_2 = arith.constant 0 : index
    %1 = vector.load %arg2[%c0_1, %c0_2] : memref<64x2xf32, #tpu.memory_space<vmem>>, vector<64x1xf32>
    %c0_3 = arith.constant 0 : index
    %c0_4 = arith.constant 0 : index
    %2 = vector.load %arg1[%c0_3, %c0_4] : memref<2x128xf32, #tpu.memory_space<vmem>>, vector<1x128xf32>
    %3 = vector.broadcast %1 : vector<64x1xf32> to vector<64x128xf32>
    %4 = vector.broadcast %2 : vector<1x128xf32> to vector<64x128xf32>
    %5 = arith.mulf %3, %4 : vector<64x128xf32>
    %6 = vector.broadcast %0 : vector<64x1xf32> to vector<64x128xf32>
    %7 = arith.addf %6, %5 : vector<64x128xf32>
    %c0_5 = arith.constant 0 : index
    %c1 = arith.constant 1 : index
    %8 = vector.load %arg2[%c0_5, %c1] : memref<64x2xf32, #tpu.memory_space<vmem>>, vector<64x1xf32>
    %c1_6 = arith.constant 1 : index
    %c0_7 = arith.constant 0 : index
    %9 = vector.load %arg1[%c1_6, %c0_7] : memref<2x128xf32, #tpu.memory_space<vmem>>, vector<1x128xf32>
    %10 = vector.broadcast %8 : vector<64x1xf32> to vector<64x128xf32>
    %11 = vector.broadcast %9 : vector<1x128xf32> to vector<64x128xf32>
    %12 = arith.mulf %10, %11 : vector<64x128xf32>
    %13 = arith.addf %7, %12 : vector<64x128xf32>
    %cst = arith.constant 0.000000e+00 : f32
    %14 = vector.broadcast %cst : f32 to vector<64x128xf32>
    %15 = arith.cmpf oge, %13, %14 : vector<64x128xf32>
    %cst_8 = arith.constant 0.00999999977 : f32
    %16 = vector.broadcast %cst_8 : f32 to vector<64x128xf32>
    %17 = arith.mulf %16, %13 : vector<64x128xf32>
    %18 = arith.select %15, %13, %17 : vector<64x128xi1>, vector<64x128xf32>
    %c0_9 = arith.constant 0 : index
    %c0_10 = arith.constant 0 : index
    %19 = vector.load %arg4[%c0_9, %c0_10] : memref<64x1xf32, #tpu.memory_space<vmem>>, vector<64x1xf32>
    %20 = vector.broadcast %19 : vector<64x1xf32> to vector<64x128xf32>
    %21 = arith.mulf %18, %20 : vector<64x128xf32>
    %cst_11 = arith.constant dense<0.000000e+00> : vector<128xf32>
    %22 = vector.multi_reduction <add>, %21, %cst_11 [0] : vector<64x128xf32> to vector<128xf32>
    %23 = vector.shape_cast %22 : vector<128xf32> to vector<1x128xf32>
    %c0_12 = arith.constant 0 : index
    %c0_13 = arith.constant 0 : index
    %24 = vector.load %arg5[%c0_12, %c0_13] : memref<1x1xf32, #tpu.memory_space<vmem>>, vector<1x1xf32>
    %25 = vector.broadcast %24 : vector<1x1xf32> to vector<1x128xf32>
    %26 = arith.addf %23, %25 : vector<1x128xf32>
    %c0_14 = arith.constant 0 : index
    %c0_15 = arith.constant 0 : index
    %27 = vector.load %arg6[%c0_14, %c0_15] : memref<1x128xf32, #tpu.memory_space<vmem>>, vector<1x128xf32>
    tpu.vector_store %arg6[%c0_14, %c0_15], %26 {strides = array<i32>} : memref<1x128xf32, #tpu.memory_space<vmem>>, vector<1x128xf32>,
    return
  }
  func.func @transform_0(%arg0: i32) -> (i32, i32) {
    %c0_i32 = arith.constant 0 : i32
    %c0_i32_0 = arith.constant 0 : i32
    return %c0_i32, %arg0 : i32, i32
  }
  func.func @transform_1(%arg0: i32) -> (i32, i32) {
    %c0_i32 = arith.constant 0 : i32
    %c0_i32_0 = arith.constant 0 : i32
    %c0_i32_1 = arith.constant 0 : i32
    return %c0_i32, %c0_i32_0 : i32, i32
  }
  func.func @transform_2(%arg0: i32) -> (i32, i32) {
    %c0_i32 = arith.constant 0 : i32
    %c0_i32_0 = arith.constant 0 : i32
    %c0_i32_1 = arith.constant 0 : i32
    return %c0_i32, %c0_i32_0 : i32, i32
  }
  func.func @transform_3(%arg0: i32) -> (i32, i32) {
    %c0_i32 = arith.constant 0 : i32
    %c0_i32_0 = arith.constant 0 : i32
    %c0_i32_1 = arith.constant 0 : i32
    return %c0_i32, %c0_i32_0 : i32, i32
  }
  func.func @transform_4(%arg0: i32) -> (i32, i32) {
    %c0_i32 = arith.constant 0 : i32
    %c0_i32_0 = arith.constant 0 : i32
    %c0_i32_1 = arith.constant 0 : i32
    return %c0_i32, %c0_i32_0 : i32, i32
  }
  func.func @transform_5(%arg0: i32) -> (i32, i32) {
    %c0_i32 = arith.constant 0 : i32
    %c0_i32_0 = arith.constant 0 : i32
    return %c0_i32, %arg0 : i32, i32
  }
}

</mosaic_0001>

<llo_original>
// kernel: critic_forward.1
$region0: #{critic_forward.1}
  #allocation0 [shape = 'u32[]', space=smem, size = 0x4, offset = 0x4, fixed_abs, tag = 'smem constant byte address 0x4 - core index']
  #allocation1 [shape = 'u32[144,128]{1,0:T(1,128)}', space=vmem, size = 0x12000, scoped, tag = 'internal scratch']
  #allocation2 [shape = 'f32[1,1]{1,0:T(1,128)S(1)}', space=vmem, size = 0x200, scoped, tag = 'scoped memory for critic_forward.1']
  %s0 = inlined_call_operand.vmem [shape: f32[2,256], index: 0, kind: input, shape index: {}]
  %s1 = inlined_call_operand.vmem [shape: f32[64,2], index: 1, kind: input, shape index: {}]
  %s2 = inlined_call_operand.vmem [shape: f32[64,1], index: 2, kind: input, shape index: {}]
  %s3 = inlined_call_operand.vmem [shape: f32[64,1], index: 3, kind: input, shape index: {}]
  %s4 = inlined_call_operand.<no memory space> [shape: f32[1,1], index: 4, kind: input, shape index: {}]
  %s5 = inlined_call_operand.hbm [shape: f32[1,256], index: 5, kind: output, shape index: {}]
  %s6 = sld [smem:[#allocation0]]
  $region53: #{critic_forward.1} parent=0
    _
  %s8 = ssub.s32 1, %s6
  %s9 = scalar_select 0, %s8, %s6
  %v10 = vstv %s4
  %11 = vst [vmem:[#allocation2] sm:$0x1] %v10
  $region1: #{critic_forward.1} parent=0
    #allocation3 [shape = 'u8[1024]{0}', space=vmem, size = 0x400, scoped, tag = 'output window, operand 0']
    #allocation4 [shape = 's32[2]{0}', space=sflag, size = 0x8, scoped, tag = 'scoped memory for critic_forward.1']
    %12 = vsyncpa [#allocation4], 0
    %s13 = scalar_lea.sflag [#allocation4], 1
    %14 = vsyncpa %s13, 0
    loop: start=0, step=1, limit=4
    $region2: #{critic_forward.1} parent=1 // loop_pre_header
      _
    $region3: #{critic_forward.1} parent=1 // loop_header
      %s16 = sphi 0, %s20
      %p17 = scmp.ge.s32.totalorder %s16, 4
      %s26 = sphi 0, %s28
      %s29 = sphi 0, %s26
      %s30 = sphi 0, %s29
      %s46 = sphi 0, %s30
      %s50 = sphi 0, %s50
      %s52 = sphi 0, %s50
      %s53 = sphi 0, %s52
      %s67 = sphi 0, %s53
      %s71 = sphi 0, %s71
      %s73 = sphi 0, %s71
      %s74 = sphi 0, %s73
      %s88 = sphi 0, %s74
      %s92 = sphi 0, %s92
      %s94 = sphi 0, %s92
      %s95 = sphi 0, %s94
      %s109 = sphi 0, %s95
      %s113 = sphi 0, %s113
      %s115 = sphi 0, %s113
      %s116 = sphi 0, %s115
      %s130 = sphi 0, %s116
      %s136 = sphi 0, %s138
      %s139 = sphi 0, %s136
      %s140 = sphi 0, %s139
      %s156 = sphi 0, %s140
    $region4: #{critic_forward.1} parent=1 // loop_header_branch
      %19 = sbr.rel (%p17) target = $region8
    $region5: #{critic_forward.1} parent=1 // loop_body
      %s21 = ssub.s32 %s16, 1
      %s22 = ssub.s32 %s16, 2
      %s23 = sadd.s32 %s16, 1
      %s24 = ssub.s32 %s16, %s23
      %p25 = scmp.eq.s32.totalorder %s24, 0
      %s27 = sadd.s32 %s26, 1
      %s28 = scalar_select %p25, %s26, %s27
      %p31 = pneg %p25
      %p32 = scmp.eq.s32.totalorder %s16, 1
      %p33 = por %p31, %p32
      %p34 = scmp.ne.s32.totalorder %s26, %s29
      %p35 = scmp.eq.s32.totalorder %s16, 0
      %p36 = por %p34, %p35
      %p37 = scmp.ne.s32.totalorder %s26, %s29
      %p38 = scmp.eq.s32.totalorder %s21, 1
      %p39 = por %p37, %p38
      %p40 = scmp.ne.s32.totalorder %s29, %s30
      %p41 = scmp.eq.s32.totalorder %s21, 0
      %p42 = por %p40, %p41
      %p43 = scmp.ne.s32.totalorder %s29, %s30
      %p44 = scmp.eq.s32.totalorder %s22, 1
      %p45 = por %p43, %p44
      %p47 = scmp.ne.s32.totalorder %s30, %s46
      %p48 = scmp.eq.s32.totalorder %s22, 0
      %p49 = por %p47, %p48
      %s51 = sadd.s32 %s50, 1
      %p54 = scmp.eq.s32.totalorder %s16, 1
      %p55 = scmp.ne.s32.totalorder %s50, %s52
      %p56 = scmp.eq.s32.totalorder %s16, 0
      %p57 = por %p55, %p56
      %p58 = scmp.ne.s32.totalorder %s50, %s52
      %p59 = scmp.eq.s32.totalorder %s21, 1
      %p60 = por %p58, %p59
      %p61 = scmp.ne.s32.totalorder %s52, %s53
      %p62 = scmp.eq.s32.totalorder %s21, 0
      %p63 = por %p61, %p62
      %p64 = scmp.ne.s32.totalorder %s52, %s53
      %p65 = scmp.eq.s32.totalorder %s22, 1
      %p66 = por %p64, %p65
      %p68 = scmp.ne.s32.totalorder %s53, %s67
      %p69 = scmp.eq.s32.totalorder %s22, 0
      %p70 = por %p68, %p69
      %s72 = sadd.s32 %s71, 1
      %p75 = scmp.eq.s32.totalorder %s16, 1
      %p76 = scmp.ne.s32.totalorder %s71, %s73
      %p77 = scmp.eq.s32.totalorder %s16, 0
      %p78 = por %p76, %p77
      %p79 = scmp.ne.s32.totalorder %s71, %s73
      %p80 = scmp.eq.s32.totalorder %s21, 1
      %p81 = por %p79, %p80
      %p82 = scmp.ne.s32.totalorder %s73, %s74
      %p83 = scmp.eq.s32.totalorder %s21, 0
      %p84 = por %p82, %p83
      %p85 = scmp.ne.s32.totalorder %s73, %s74
      %p86 = scmp.eq.s32.totalorder %s22, 1
      %p87 = por %p85, %p86
      %p89 = scmp.ne.s32.totalorder %s74, %s88
      %p90 = scmp.eq.s32.totalorder %s22, 0
      %p91 = por %p89, %p90
      %s93 = sadd.s32 %s92, 1
      %p96 = scmp.eq.s32.totalorder %s16, 1
      %p97 = scmp.ne.s32.totalorder %s92, %s94
      %p98 = scmp.eq.s32.totalorder %s16, 0
      %p99 = por %p97, %p98
      %p100 = scmp.ne.s32.totalorder %s92, %s94
      %p101 = scmp.eq.s32.totalorder %s21, 1
      %p102 = por %p100, %p101
      %p103 = scmp.ne.s32.totalorder %s94, %s95
      %p104 = scmp.eq.s32.totalorder %s21, 0
      %p105 = por %p103, %p104
      %p106 = scmp.ne.s32.totalorder %s94, %s95
      %p107 = scmp.eq.s32.totalorder %s22, 1
      %p108 = por %p106, %p107
      %p110 = scmp.ne.s32.totalorder %s95, %s109
      %p111 = scmp.eq.s32.totalorder %s22, 0
      %p112 = por %p110, %p111
      %s114 = sadd.s32 %s113, 1
      %p117 = scmp.eq.s32.totalorder %s16, 1
      %p118 = scmp.ne.s32.totalorder %s113, %s115
      %p119 = scmp.eq.s32.totalorder %s16, 0
      %p120 = por %p118, %p119
      %p121 = scmp.ne.s32.totalorder %s113, %s115
      %p122 = scmp.eq.s32.totalorder %s21, 1
      %p123 = por %p121, %p122
      %p124 = scmp.ne.s32.totalorder %s115, %s116
      %p125 = scmp.eq.s32.totalorder %s21, 0
      %p126 = por %p124, %p125
      %p127 = scmp.ne.s32.totalorder %s115, %s116
      %p128 = scmp.eq.s32.totalorder %s22, 1
      %p129 = por %p127, %p128
      %p131 = scmp.ne.s32.totalorder %s116, %s130
      %p132 = scmp.eq.s32.totalorder %s22, 0
      %p133 = por %p131, %p132
      %s134 = ssub.s32 %s16, %s23
      %p135 = scmp.eq.s32.totalorder %s134, 0
      %s137 = sadd.s32 %s136, 1
      %s138 = scalar_select %p135, %s136, %s137
      %p141 = pneg %p135
      %p142 = scmp.eq.s32.totalorder %s16, 1
      %p143 = por %p141, %p142
      %p144 = scmp.ne.s32.totalorder %s136, %s139
      %p145 = scmp.eq.s32.totalorder %s16, 0
      %p146 = por %p144, %p145
      %p147 = scmp.ne.s32.totalorder %s136, %s139
      %p148 = scmp.eq.s32.totalorder %s21, 1
      %p149 = por %p147, %p148
      %p150 = scmp.ne.s32.totalorder %s139, %s140
      %p151 = scmp.eq.s32.totalorder %s21, 0
      %p152 = por %p150, %p151
      %p153 = scmp.ne.s32.totalorder %s139, %s140
      %p154 = scmp.eq.s32.totalorder %s22, 1
      %p155 = por %p153, %p154
      %p157 = scmp.ne.s32.totalorder %s140, %s156
      %p158 = scmp.eq.s32.totalorder %s22, 0
      %p159 = por %p157, %p158
      %p160 = scmp.le.s32.totalorder 1, %s16
      %p161 = scmp.lt.s32.totalorder %s16, 3
      %p162 = pnand %p160, %p161
      %p163 = pneg %p162
      // Predicated region
      $region9: #{critic_forward.1} parent=5 // pred_check
        _
      $region10: #{critic_forward.1} parent=5 // pred_check_branch
        %165 = sbr.rel (%p162) target = $region12
      $region11: #{critic_forward.1} parent=5 // pred_region
        %s166 = ssub.s32 %s16, 1
        // Predicated region
        $region13: #{critic_forward.1} parent=11 // pred_check
          %p167 = pneg %p63
        $region14: #{critic_forward.1} parent=11 // pred_check_branch
          %169 = sbr.rel (%p167) target = $region16
        $region15: #{critic_forward.1} parent=11 // pred_region
          _
        $region16: #{critic_forward.1} parent=11 // pred_fallthru
          _
        // Predicated region
        $region17: #{critic_forward.1} parent=11 // pred_check
          %p170 = pneg %p84
        $region18: #{critic_forward.1} parent=11 // pred_check_branch
          %172 = sbr.rel (%p170) target = $region20
        $region19: #{critic_forward.1} parent=11 // pred_region
          _
        $region20: #{critic_forward.1} parent=11 // pred_fallthru
          _
        // Predicated region
        $region21: #{critic_forward.1} parent=11 // pred_check
          %p173 = pneg %p105
        $region22: #{critic_forward.1} parent=11 // pred_check_branch
          %175 = sbr.rel (%p173) target = $region24
        $region23: #{critic_forward.1} parent=11 // pred_region
          _
        $region24: #{critic_forward.1} parent=11 // pred_fallthru
          _
        // Predicated region
        $region25: #{critic_forward.1} parent=11 // pred_check
          %p176 = pneg %p126
        $region26: #{critic_forward.1} parent=11 // pred_check_branch
          %178 = sbr.rel (%p176) target = $region28
        $region27: #{critic_forward.1} parent=11 // pred_region
          _
        $region28: #{critic_forward.1} parent=11 // pred_fallthru
          _
      $region12: #{critic_forward.1} parent=5 // pred_fallthru
        _
      %p179 = scmp.lt.s32.totalorder %s16, 2
      // Predicated region
      $region29: #{critic_forward.1} parent=5 // pred_check
        %p180 = pneg %p179
      $region30: #{critic_forward.1} parent=5 // pred_check_branch
        %182 = sbr.rel (%p180) target = $region32
      $region31: #{critic_forward.1} parent=5 // pred_region
        // Predicated region
        $region33: #{critic_forward.1} parent=31 // pred_check
          %p183 = pneg %p36
        $region34: #{critic_forward.1} parent=31 // pred_check_branch
          %185 = sbr.rel (%p183) target = $region36
        $region35: #{critic_forward.1} parent=31 // pred_region
          %p186 = scmp.lt.s32.totalorder %s16, 1
          %s187 = scalar_select %p186, %s16, 1
          %s188 = smul.addr %s187, 2
          %s189 = scalar_lea.vmem %s0, %s188
        $region36: #{critic_forward.1} parent=31 // pred_fallthru
          _
      $region32: #{critic_forward.1} parent=5 // pred_fallthru
        _
      %p190 = scmp.le.s32.totalorder 1, %s16
      %p191 = scmp.lt.s32.totalorder %s16, 3
      %p192 = pnand %p190, %p191
      %p193 = pneg %p192
      // Predicated region
      $region37: #{critic_forward.1} parent=5 // pred_check
        _
      $region38: #{critic_forward.1} parent=5 // pred_check_branch
        %195 = sbr.rel (%p192) target = $region40
      $region39: #{critic_forward.1} parent=5 // pred_region
        %s196 = ssub.s32 %s16, 1
        %p197 = scmp.lt.s32.totalorder %s21, 1
        %s198 = scalar_select %p197, %s21, 1
        %s199 = smul.addr %s198, 2
        %s200 = scalar_lea.vmem %s0, %s199
        %p201 = pneg %p42
        %p202 = pneg %p39
        %p203 = pneg %p63
        %p204 = pneg %p60
        %p205 = pneg %p84
        %p206 = pneg %p81
        %p207 = pneg %p105
        %p208 = pneg %p102
        %p209 = pneg %p126
        %p210 = pneg %p123
        %p211 = pneg %p152
        %p212 = pneg %p149
        %s213 = sand.u32 %s139, 1
        %s214 = scalar_lea.sflag [#allocation4], %s213
        %s215 = sand.u32 %s139, 1
        %s216 = scalar_lea.vmem [#allocation3], %s215
        %p217 = scmp.lt.s32.totalorder %s21, 1
        %s218 = scalar_select %p217, %s21, 1
        %s219 = smul.addr %s218, 2
        %s220 = scalar_lea.vmem %s0, %s219
        %v221 = vld [vmem:[%s2] sm:$0xff]
        %v222 = vld [vmem:[%s2 + $0x8] sm:$0xff]
        %v223 = vld [vmem:[%s2 + $0x10] sm:$0xff]
        %v224 = vld [vmem:[%s2 + $0x18] sm:$0xff]
        %v225 = vld [vmem:[%s2 + $0x20] sm:$0xff]
        %v226 = vld [vmem:[%s2 + $0x28] sm:$0xff]
        %v227 = vld [vmem:[%s2 + $0x30] sm:$0xff]
        %v228 = vld [vmem:[%s2 + $0x38] sm:$0xff]
        %v229 = vld [vmem:[%s1] sm:$0xff]
        %v230 = vld [vmem:[%s1 + $0x8] sm:$0xff]
        %v231 = vld [vmem:[%s1 + $0x10] sm:$0xff]
        %v232 = vld [vmem:[%s1 + $0x18] sm:$0xff]
        %v233 = vld [vmem:[%s1 + $0x20] sm:$0xff]
        %v234 = vld [vmem:[%s1 + $0x28] sm:$0xff]
        %v235 = vld [vmem:[%s1 + $0x30] sm:$0xff]
        %v236 = vld [vmem:[%s1 + $0x38] sm:$0xff]
        %v237 = vld [vmem:[%s220] sm:$0x1]
        %239 = vset.pattern.permute.xlu0 0
        %240 = vperm.xlu0 %239, %v229
        %v241 = vpop.permute.xlu0 %240
        %244 = vset.pattern.permute.xlu0 0
        %245 = vperm.xlu0 %244, %v230
        %v246 = vpop.permute.xlu0 %245
        %249 = vset.pattern.permute.xlu0 0
        %250 = vperm.xlu0 %249, %v231
        %v251 = vpop.permute.xlu0 %250
        %254 = vset.pattern.permute.xlu0 0
        %255 = vperm.xlu0 %254, %v232
        %v256 = vpop.permute.xlu0 %255
        %259 = vset.pattern.permute.xlu0 0
        %260 = vperm.xlu0 %259, %v233
        %v261 = vpop.permute.xlu0 %260
        %264 = vset.pattern.permute.xlu0 0
        %265 = vperm.xlu0 %264, %v234
        %v266 = vpop.permute.xlu0 %265
        %269 = vset.pattern.permute.xlu0 0
        %270 = vperm.xlu0 %269, %v235
        %v271 = vpop.permute.xlu0 %270
        %274 = vset.pattern.permute.xlu0 0
        %275 = vperm.xlu0 %274, %v236
        %v276 = vpop.permute.xlu0 %275
        %v278 = vlaneseq
        %v279 = vshrl.u32 %v278, 7
        %v280 = vsub.s32 0, %v279
        %v281 = vrot.slane %v237, %v280
        %v282 = vmul.f32 %v241, %v281
        %v283 = vmul.f32 %v246, %v281
        %v284 = vmul.f32 %v251, %v281
        %v285 = vmul.f32 %v256, %v281
        %v286 = vmul.f32 %v261, %v281
        %v287 = vmul.f32 %v266, %v281
        %v288 = vmul.f32 %v271, %v281
        %v289 = vmul.f32 %v276, %v281
        %291 = vset.pattern.permute.xlu0 0
        %292 = vperm.xlu0 %291, %v221
        %v293 = vpop.permute.xlu0 %292
        %296 = vset.pattern.permute.xlu0 0
        %297 = vperm.xlu0 %296, %v222
        %v298 = vpop.permute.xlu0 %297
        %301 = vset.pattern.permute.xlu0 0
        %302 = vperm.xlu0 %301, %v223
        %v303 = vpop.permute.xlu0 %302
        %306 = vset.pattern.permute.xlu0 0
        %307 = vperm.xlu0 %306, %v224
        %v308 = vpop.permute.xlu0 %307
        %311 = vset.pattern.permute.xlu0 0
        %312 = vperm.xlu0 %311, %v225
        %v313 = vpop.permute.xlu0 %312
        %316 = vset.pattern.permute.xlu0 0
        %317 = vperm.xlu0 %316, %v226
        %v318 = vpop.permute.xlu0 %317
        %321 = vset.pattern.permute.xlu0 0
        %322 = vperm.xlu0 %321, %v227
        %v323 = vpop.permute.xlu0 %322
        %326 = vset.pattern.permute.xlu0 0
        %327 = vperm.xlu0 %326, %v228
        %v328 = vpop.permute.xlu0 %327
        %v330 = vadd.f32 %v293, %v282
        %v331 = vadd.f32 %v298, %v283
        %v332 = vadd.f32 %v303, %v284
        %v333 = vadd.f32 %v308, %v285
        %v334 = vadd.f32 %v313, %v286
        %v335 = vadd.f32 %v318, %v287
        %v336 = vadd.f32 %v323, %v288
        %v337 = vadd.f32 %v328, %v289
        %v338 = vld [vmem:[%s220 + $0x1] sm:$0x1]
        %339 = vset.pattern.permute.xlu0 1
        %340 = vperm.xlu0 %339, %v229
        %v341 = vpop.permute.xlu0 %340
        %343 = vset.pattern.permute.xlu0 1
        %344 = vperm.xlu0 %343, %v230
        %v345 = vpop.permute.xlu0 %344
        %347 = vset.pattern.permute.xlu0 1
        %348 = vperm.xlu0 %347, %v231
        %v349 = vpop.permute.xlu0 %348
        %351 = vset.pattern.permute.xlu0 1
        %352 = vperm.xlu0 %351, %v232
        %v353 = vpop.permute.xlu0 %352
        %355 = vset.pattern.permute.xlu0 1
        %356 = vperm.xlu0 %355, %v233
        %v357 = vpop.permute.xlu0 %356
        %359 = vset.pattern.permute.xlu0 1
        %360 = vperm.xlu0 %359, %v234
        %v361 = vpop.permute.xlu0 %360
        %363 = vset.pattern.permute.xlu0 1
        %364 = vperm.xlu0 %363, %v235
        %v365 = vpop.permute.xlu0 %364
        %367 = vset.pattern.permute.xlu0 1
        %368 = vperm.xlu0 %367, %v236
        %v369 = vpop.permute.xlu0 %368
        %v371 = vlaneseq
        %v372 = vshrl.u32 %v371, 7
        %v373 = vsub.s32 0, %v372
        %v374 = vrot.slane %v338, %v373
        %v375 = vmul.f32 %v341, %v374
        %v376 = vmul.f32 %v345, %v374
        %v377 = vmul.f32 %v349, %v374
        %v378 = vmul.f32 %v353, %v374
        %v379 = vmul.f32 %v357, %v374
        %v380 = vmul.f32 %v361, %v374
        %v381 = vmul.f32 %v365, %v374
        %v382 = vmul.f32 %v369, %v374
        %v383 = vadd.f32 %v330, %v375
        %v384 = vadd.f32 %v331, %v376
        %v385 = vadd.f32 %v332, %v377
        %v386 = vadd.f32 %v333, %v378
        %v387 = vadd.f32 %v334, %v379
        %v388 = vadd.f32 %v335, %v380
        %v389 = vadd.f32 %v336, %v381
        %v390 = vadd.f32 %v337, %v382
        %vm391 = vcmp.ge.f32.partialorder %v383, 0.0
        %vm392 = vcmp.ge.f32.partialorder %v384, 0.0
        %vm393 = vcmp.ge.f32.partialorder %v385, 0.0
        %vm394 = vcmp.ge.f32.partialorder %v386, 0.0
        %vm395 = vcmp.ge.f32.partialorder %v387, 0.0
        %vm396 = vcmp.ge.f32.partialorder %v388, 0.0
        %vm397 = vcmp.ge.f32.partialorder %v389, 0.0
        %vm398 = vcmp.ge.f32.partialorder %v390, 0.0
        %v399 = vmul.f32 %v383, 0.01
        %v400 = vmul.f32 %v384, 0.01
        %v401 = vmul.f32 %v385, 0.01
        %v402 = vmul.f32 %v386, 0.01
        %v403 = vmul.f32 %v387, 0.01
        %v404 = vmul.f32 %v388, 0.01
        %v405 = vmul.f32 %v389, 0.01
        %v406 = vmul.f32 %v390, 0.01
        %v407 = vsel %vm391, %v383, %v399
        %v408 = vsel %vm392, %v384, %v400
        %v409 = vsel %vm393, %v385, %v401
        %v410 = vsel %vm394, %v386, %v402
        %v411 = vsel %vm395, %v387, %v403
        %v412 = vsel %vm396, %v388, %v404
        %v413 = vsel %vm397, %v389, %v405
        %v414 = vsel %vm398, %v390, %v406
        %v415 = vld [vmem:[%s3] sm:$0xff]
        %v416 = vld [vmem:[%s3 + $0x8] sm:$0xff]
        %v417 = vld [vmem:[%s3 + $0x10] sm:$0xff]
        %v418 = vld [vmem:[%s3 + $0x18] sm:$0xff]
        %v419 = vld [vmem:[%s3 + $0x20] sm:$0xff]
        %v420 = vld [vmem:[%s3 + $0x28] sm:$0xff]
        %v421 = vld [vmem:[%s3 + $0x30] sm:$0xff]
        %v422 = vld [vmem:[%s3 + $0x38] sm:$0xff]
        %424 = vset.pattern.permute.xlu0 0
        %425 = vperm.xlu0 %424, %v415
        %v426 = vpop.permute.xlu0 %425
        %429 = vset.pattern.permute.xlu0 0
        %430 = vperm.xlu0 %429, %v416
        %v431 = vpop.permute.xlu0 %430
        %434 = vset.pattern.permute.xlu0 0
        %435 = vperm.xlu0 %434, %v417
        %v436 = vpop.permute.xlu0 %435
        %439 = vset.pattern.permute.xlu0 0
        %440 = vperm.xlu0 %439, %v418
        %v441 = vpop.permute.xlu0 %440
        %444 = vset.pattern.permute.xlu0 0
        %445 = vperm.xlu0 %444, %v419
        %v446 = vpop.permute.xlu0 %445
        %449 = vset.pattern.permute.xlu0 0
        %450 = vperm.xlu0 %449, %v420
        %v451 = vpop.permute.xlu0 %450
        %454 = vset.pattern.permute.xlu0 0
        %455 = vperm.xlu0 %454, %v421
        %v456 = vpop.permute.xlu0 %455
        %459 = vset.pattern.permute.xlu0 0
        %460 = vperm.xlu0 %459, %v422
        %v461 = vpop.permute.xlu0 %460
        %v463 = vmul.f32 %v407, %v426
        %v464 = vmul.f32 %v408, %v431
        %v465 = vmul.f32 %v409, %v436
        %v466 = vmul.f32 %v410, %v441
        %v467 = vmul.f32 %v411, %v446
        %v468 = vmul.f32 %v412, %v451
        %v469 = vmul.f32 %v413, %v456
        %v470 = vmul.f32 %v414, %v461
        %v471 = vadd.f32 %v463, %v464
        %v472 = vadd.f32 %v471, %v465
        %v473 = vadd.f32 %v472, %v466
        %v474 = vadd.f32 %v473, %v467
        %v475 = vadd.f32 %v474, %v468
        %v476 = vadd.f32 %v475, %v469
        %v477 = vadd.f32 %v476, %v470
        %v478 = vrot.slane %v477, 4
        %v479 = vadd.f32 %v477, %v478
        %v480 = vrot.slane %v479, 2
        %v481 = vadd.f32 %v479, %v480
        %v482 = vrot.slane %v481, 1
        %v483 = vadd.f32 %v481, %v482
        %v484 = vld [vmem:[#allocation2] sm:$0x1]
        %486 = vset.pattern.permute.xlu0 0
        %487 = vperm.xlu0 %486, %v484
        %v488 = vpop.permute.xlu0 %487
        %v490 = vlaneseq
        %v491 = vshrl.u32 %v490, 7
        %v492 = vsub.s32 0, %v491
        %v493 = vrot.slane %v488, %v492
        %v494 = vadd.f32 %v483, %v493
        %495 = vst [vmem:[%s216] sm:$0x1] %v494
        %s496 = sand.u32 %s139, 1
        %s497 = scalar_lea.sflag [#allocation4], %s496
        %s498 = sand.u32 %s139, 1
        %s499 = scalar_lea.vmem [#allocation3], %s498
        // Predicated region
        $region41: #{critic_forward.1} parent=39 // pred_check
          %p500 = pneg %p149
        $region42: #{critic_forward.1} parent=39 // pred_check_branch
          %502 = sbr.rel (%p500) target = $region44
        $region43: #{critic_forward.1} parent=39 // pred_region
          %s504 = ssub.s32 16, 16
          %505 = vsyncadd %s497, %s504
          %s506 = smul.addr %s21, 16
          %s507 = scalar_lea.hbm %s5, %s506
          %s509 = sshll.u32 %s499, 4
          %s510 = int_to_ptr.vmem [resolvable:$true] %s509
          %512 = dma.vmem_to_hbm [thread:$0]  %s510, 16, %s507, %s497
        $region44: #{critic_forward.1} parent=39 // pred_fallthru
          _
      $region40: #{critic_forward.1} parent=5 // pred_fallthru
        _
      %p513 = scmp.le.s32.totalorder 2, %s16
      // Predicated region
      $region45: #{critic_forward.1} parent=5 // pred_check
        %p514 = pneg %p513
      $region46: #{critic_forward.1} parent=5 // pred_check_branch
        %516 = sbr.rel (%p514) target = $region48
      $region47: #{critic_forward.1} parent=5 // pred_region
        %s517 = ssub.s32 %s16, 2
        // Predicated region
        $region49: #{critic_forward.1} parent=47 // pred_check
          %p518 = pneg %p155
        $region50: #{critic_forward.1} parent=47 // pred_check_branch
          %520 = sbr.rel (%p518) target = $region52
        $region51: #{critic_forward.1} parent=47 // pred_region
          %s521 = sand.u32 %s140, 1
          %s522 = scalar_lea.sflag [#allocation4], %s521
          %s523 = sand.u32 %s140, 1
          %s524 = scalar_lea.vmem [#allocation3], %s523
          %525 = dma.done %s522, 16
        $region52: #{critic_forward.1} parent=47 // pred_fallthru
          _
      $region48: #{critic_forward.1} parent=5 // pred_fallthru
        _
    $region6: #{critic_forward.1} parent=1 // loop_footer
      %s20 = sadd.s32 1, %s16
    $region7: #{critic_forward.1} parent=1 // loop_footer_branch
      %15 = sbr.rel target = $region3
    $region8: #{critic_forward.1} parent=1 // loop_exit
      _
    %526 = vsyncpa [#allocation4], 1
    %s527 = scalar_lea.sflag [#allocation4], 1
    %528 = vsyncpa %s527, 1

</llo_original>
